<compile_context>
chip_gen: v7x
topology: tpu7x:2x2x1
jax: 0.10.0
libtpu: 0.0.40
codegen_flags: <defaults>
</compile_context>

<pallas_src>
import functools

import jax
import jax.numpy as jnp
from jax.experimental import pallas as pl
from jax.experimental.pallas import tpu as pltpu


def _bayesian_loss_weighting_kernel(losses_ref, log_vars_ref,
                                    weights_ref, mean_ref, *, inv_n):
    # losses_ref / log_vars_ref: (1, n) f32 VMEM
    # weights_ref:               (1, n) f32 VMEM
    # mean_ref:                  (1, 1) f32 SMEM (scalar result)
    losses = losses_ref[...]
    log_vars = log_vars_ref[...]

    weights = jnp.exp(-log_vars)               # EUP transcendental
    weighted = weights * losses + log_vars     # VPU elementwise

    weights_ref[...] = weights                 # single small masked store
    # Cross-lane reduce (XLU) -> scalar; divide by the true num_losses.
    mean_ref[0, 0] = jnp.sum(weighted) * inv_n


def bayesian_loss_weighting(losses, log_vars):
    """JAX/Pallas equivalent of BayesianLossWeighting.forward.

    Args:
      losses:   (num_losses,) f32
      log_vars: (num_losses,) f32 parameter
    Returns:
      (mean_weighted_loss: scalar f32, weights: (num_losses,) f32)
    """
    assert losses.shape == log_vars.shape and losses.ndim == 1
    n = losses.shape[0]
    assert n > 0

    # (n,) -> (1, n): layout-only reshape, no data movement worth noting.
    losses2 = losses.astype(jnp.float32).reshape(1, n)
    log_vars2 = log_vars.astype(jnp.float32).reshape(1, n)

    cost = pl.CostEstimate(
        flops=3 * n,             # mul + add per lane + reduce
        transcendentals=n,       # exp per lane
        bytes_accessed=4 * (3 * n + 1),
    )

    weights_out, mean_out = pl.pallas_call(
        functools.partial(_bayesian_loss_weighting_kernel, inv_n=1.0 / n),
        out_shape=(
            jax.ShapeDtypeStruct((1, n), jnp.float32),
            jax.ShapeDtypeStruct((1, 1), jnp.float32),
        ),
        in_specs=[
            pl.BlockSpec(memory_space=pltpu.VMEM),
            pl.BlockSpec(memory_space=pltpu.VMEM),
        ],
        out_specs=(
            pl.BlockSpec(memory_space=pltpu.VMEM),
            pl.BlockSpec(memory_space=pltpu.SMEM),
        ),
        cost_estimate=cost,
    )(losses2, log_vars2)

    return mean_out[0, 0], weights_out[0]


if __name__ == "__main__":
    num_losses = 8

    # Deterministic example inputs: module inits log_vars to zeros; perturb
    # slightly (deterministically) so the exp/weighting path is exercised.
    key = jax.random.PRNGKey(0)
    k_losses, k_logvars = jax.random.split(key)
    losses = jax.random.uniform(k_losses, (num_losses,), dtype=jnp.float32)
    log_vars = 0.1 * jax.random.normal(k_logvars, (num_losses,), dtype=jnp.float32)

    mean_loss, weights = bayesian_loss_weighting(losses, log_vars)
    jax.block_until_ready((mean_loss, weights))

    # Reference check in plain JAX.
    ref_weights = jnp.exp(-log_vars)
    ref_mean = jnp.mean(ref_weights * losses + log_vars)
    assert jnp.allclose(mean_loss, ref_mean, rtol=1e-5, atol=1e-5)
    assert jnp.allclose(weights, ref_weights, rtol=1e-5, atol=1e-5)

    print("KERNEL_OK")
</pallas_src>

<mosaic_0001>
module attributes {stable_mosaic.version = 11 : i64} {
  func.func @_bayesian_loss_weighting_kernel(%arg0: memref<1x8xf32, #tpu.memory_space<vmem>>, %arg1: memref<1x8xf32, #tpu.memory_space<vmem>>, %arg2: memref<1x8xf32, #tpu.memory_space<vmem>>, %arg3: memref<1x1xf32, #tpu.memory_space<smem>>) attributes {dimension_semantics = [], scalar_prefetch = 0 : i64, scratch_operands = 0 : i64, tpu.core_type = #tpu.core_type<tc>} {
    %c0 = arith.constant 0 : index
    %c0_0 = arith.constant 0 : index
    %0 = vector.load %arg0[%c0, %c0_0] : memref<1x8xf32, #tpu.memory_space<vmem>>, vector<1x8xf32>
    %c0_1 = arith.constant 0 : index
    %c0_2 = arith.constant 0 : index
    %1 = vector.load %arg1[%c0_1, %c0_2] : memref<1x8xf32, #tpu.memory_space<vmem>>, vector<1x8xf32>
    %cst = arith.constant 0.000000e+00 : f32
    %2 = vector.broadcast %cst : f32 to vector<1x8xf32>
    %3 = arith.subf %2, %1 : vector<1x8xf32>
    %4 = math.exp %3 : vector<1x8xf32>
    %5 = arith.mulf %4, %0 : vector<1x8xf32>
    %6 = arith.addf %5, %1 : vector<1x8xf32>
    %c0_3 = arith.constant 0 : index
    %c0_4 = arith.constant 0 : index
    %7 = vector.load %arg2[%c0_3, %c0_4] : memref<1x8xf32, #tpu.memory_space<vmem>>, vector<1x8xf32>
    tpu.vector_store %arg2[%c0_3, %c0_4], %4 {strides = array<i32>} : memref<1x8xf32, #tpu.memory_space<vmem>>, vector<1x8xf32>,
    %8 = vector.shape_cast %6 : vector<1x8xf32> to vector<1x1x8xf32>
    %cst_5 = arith.constant dense<0.000000e+00> : vector<1xf32>
    %9 = vector.multi_reduction <add>, %8, %cst_5 [1, 2] : vector<1x1x8xf32> to vector<1xf32>
    %10 = vector.shape_cast %9 : vector<1xf32> to vector<1x1x1xf32>
    %11 = vector.extract %10[0, 0, 0] : f32 from vector<1x1x1xf32>
    %cst_6 = arith.constant 1.250000e-01 : f32
    %12 = arith.mulf %11, %cst_6 : f32
    %c0_7 = arith.constant 0 : index
    %c0_8 = arith.constant 0 : index
    %13 = memref.load %arg3[%c0_7, %c0_8] : memref<1x1xf32, #tpu.memory_space<smem>>
    memref.store %12, %arg3[%c0_7, %c0_8] : memref<1x1xf32, #tpu.memory_space<smem>>
    return
  }
}

</mosaic_0001>

<llo_original>
// kernel: tpu_custom_call.1
$region0: #{tpu_custom_call.1}
  #allocation0 [shape = 'u32[]', space=smem, size = 0x4, offset = 0x4, fixed_abs, tag = 'smem constant byte address 0x4 - core index']
  #allocation1 [shape = 'u32[144,128]{1,0:T(1,128)}', space=vmem, size = 0x12000, scoped, tag = 'internal scratch']
  %s0 = inlined_call_operand.hbm [shape: f32[1,8], index: 0, kind: input, shape index: {}]
  %s1 = inlined_call_operand.vmem [shape: f32[1,8], index: 1, kind: input, shape index: {}]
  %s2 = inlined_call_operand.hbm [shape: f32[1,8], index: 2, kind: output, shape index: {0}]
  %s3 = inlined_call_operand.hbm [shape: f32[1,1], index: 3, kind: output, shape index: {1}]
  %4 = xla_tuple %s2, %s3
  %s5 = sld [smem:[#allocation0]]
  $region30: #{tpu_custom_call.1} parent=0
    _
  %s7 = ssub.s32 1, %s5
  %s8 = scalar_select 0, %s7, %s5
  $region1: #{tpu_custom_call.1} parent=0
    #allocation2 [shape = 'u8[512]{0}', space=vmem, size = 0x400, scoped, tag = 'input window, operand 0, single buffered']
    #allocation3 [shape = 's32[1]{0}', space=sflag, size = 0x4, scoped, tag = 'scoped memory for tpu_custom_call.1']
    #allocation4 [shape = 's32[1]{0}', space=sflag, size = 0x4, scoped, tag = 'scoped memory for tpu_custom_call.1']
    #allocation5 [shape = 's32[1]{0}', space=sflag, size = 0x4, scoped, tag = 'scoped memory for tpu_custom_call.1']
    #allocation6 [shape = 'u8[512]{0}', space=vmem, size = 0x400, scoped, tag = 'output window, operand 0, single buffered']
    #allocation7 [shape = 'u8[512]{0}', space=smem, size = 0x200, scoped, tag = 'output window, operand 1, single buffered']
    %9 = vsyncpa [#allocation3], 0
    %10 = vsyncpa [#allocation4], 0
    %11 = vsyncpa [#allocation5], 0
    // Predicated region
    $region2: #{tpu_custom_call.1} parent=1 // pred_check
      _
    $region3: #{tpu_custom_call.1} parent=1 // pred_check_branch
      %13 = sbr.rel (0) target = $region5
    $region4: #{tpu_custom_call.1} parent=1 // pred_region
      %s15 = ssub.s32 16, 16
      %16 = vsyncadd [#allocation3], %s15
      %s18 = sshll.u32 [#allocation2], 4
      %s19 = int_to_ptr.vmem [resolvable:$true] %s18
      %21 = dma.hbm_to_vmem [thread:$0]  %s0, 16, %s19, [#allocation3]
    $region5: #{tpu_custom_call.1} parent=1 // pred_fallthru
      _
    // Predicated region
    $region6: #{tpu_custom_call.1} parent=1 // pred_check
      _
    $region7: #{tpu_custom_call.1} parent=1 // pred_check_branch
      %23 = sbr.rel (0) target = $region9
    $region8: #{tpu_custom_call.1} parent=1 // pred_region
      _
    $region9: #{tpu_custom_call.1} parent=1 // pred_fallthru
      _
    // Predicated region
    $region10: #{tpu_custom_call.1} parent=1 // pred_check
      _
    $region11: #{tpu_custom_call.1} parent=1 // pred_check_branch
      %25 = sbr.rel (0) target = $region13
    $region12: #{tpu_custom_call.1} parent=1 // pred_region
      %26 = dma.done [#allocation3], 16
    $region13: #{tpu_custom_call.1} parent=1 // pred_fallthru
      _
    %v27 = vld [vmem:[#allocation2] sm:$0x1]
    %v28 = vld [vmem:[%s1] sm:$0x1]
    %v29 = vsub.f32 0.0, %v28
    %v30 = vmul.f32 %v29, 1.442695
    %v31 = vpow.pop %v30
    %v32 = vmul.f32 %v31, %v27
    %v33 = vadd.f32 %v32, %v28
    %vm34 = vcmask 57344
    %35 = vst.msk [vmem:[#allocation6] sm:$0x1] %vm34, %v31
    %v36 = vsel %vm34, %v33, 0.0
    %37 = vadd.xlane.f32.xlu0 %v36
    %v38 = vpop.xlane.xlu0 %37
    %v39 = vrot.slane %v38, 4
    %v40 = vadd.f32 %v38, %v39
    %v41 = vrot.slane %v40, 2
    %v42 = vadd.f32 %v40, %v41
    %v43 = vrot.slane %v42, 1
    %v44 = vadd.f32 %v42, %v43
    %s45 = vtos %v44
    %s46 = smul.f32 %s45, 0.125
    %s47 = scalar_lea.smem [#allocation7], 0
    %48 = sst [smem:[%s47]] %s46
    // Predicated region
    $region14: #{tpu_custom_call.1} parent=1 // pred_check
      _
    $region15: #{tpu_custom_call.1} parent=1 // pred_check_branch
      %50 = sbr.rel (0) target = $region17
    $region16: #{tpu_custom_call.1} parent=1 // pred_region
      %s52 = ssub.s32 16, 16
      %53 = vsyncadd [#allocation4], %s52
      %s55 = sshll.u32 [#allocation6], 4
      %s56 = int_to_ptr.vmem [resolvable:$true] %s55
      %58 = dma.vmem_to_hbm [thread:$0]  %s56, 16, %s2, [#allocation4]
    $region17: #{tpu_custom_call.1} parent=1 // pred_fallthru
      _
    // Predicated region
    $region18: #{tpu_custom_call.1} parent=1 // pred_check
      _
    $region19: #{tpu_custom_call.1} parent=1 // pred_check_branch
      %60 = sbr.rel (0) target = $region21
    $region20: #{tpu_custom_call.1} parent=1 // pred_region
      %s62 = ssub.s32 16, 16
      %63 = vsyncadd [#allocation5], %s62
      %66 = dma.smem_to_hbm [#allocation7], 16, %s3, [#allocation5]
    $region21: #{tpu_custom_call.1} parent=1 // pred_fallthru
      _
    // Predicated region
    $region22: #{tpu_custom_call.1} parent=1 // pred_check
      _
    $region23: #{tpu_custom_call.1} parent=1 // pred_check_branch
      %68 = sbr.rel (0) target = $region25
    $region24: #{tpu_custom_call.1} parent=1 // pred_region
      %69 = dma.done [#allocation4], 16
    $region25: #{tpu_custom_call.1} parent=1 // pred_fallthru
      _
    // Predicated region
    $region26: #{tpu_custom_call.1} parent=1 // pred_check
      _
    $region27: #{tpu_custom_call.1} parent=1 // pred_check_branch
      %71 = sbr.rel (0) target = $region29
    $region28: #{tpu_custom_call.1} parent=1 // pred_region
      %72 = dma.done [#allocation5], 16
    $region29: #{tpu_custom_call.1} parent=1 // pred_fallthru
      _
    %73 = sfence
    %74 = vsyncpa [#allocation3], 1
    %75 = vsyncpa [#allocation4], 1
    %76 = vsyncpa [#allocation5], 1

</llo_original>
